<compile_context>
chip_gen: v5e
topology: v5e:2x2
jax: 0.10.0
libtpu: 0.0.40
codegen_flags: <defaults>
</compile_context>

<pallas_src>
import jax
import jax.numpy as jnp
from jax.experimental import pallas as pl
from jax.experimental.pallas import tpu as pltpu  # noqa: F401  (TPU-specific tuning hooks)

D_MODEL = 32
N_HEAD = 4
SEQ = 8
BATCH = 2
EPS = 1e-12        # matches the module's custom LayerNorm default (TF-style)
NEG_INF = -1e30


def _round_up(v, m):
    return (v + m - 1) // m * m


def _slab_layout(d):
    """128-lane-aligned column offsets for [w_qkv | w_out | w_fc] inside the packed slab."""
    c0 = 0
    c1 = c0 + _round_up(3 * d, 128)   # start of w_out
    c2 = c1 + _round_up(d, 128)       # start of w_fc
    c3 = c2 + _round_up(4 * d, 128)   # total lane width
    return c0, c1, c2, c3


def _layernorm(x, w, b):
    u = jnp.mean(x, axis=-1, keepdims=True)
    s = jnp.mean((x - u) ** 2, axis=-1, keepdims=True)
    return w * ((x - u) * jax.lax.rsqrt(s + EPS)) + b


def _make_kernel(d_model, n_head, n_batch, n_tokens, with_attn_mask=False):
    d = d_model
    dh = d // n_head
    T = n_tokens
    c0, c1, c2, _ = _slab_layout(d)

    def compute(x_ref, slab_ref, wpj_ref, extra_mask, y_ref):
        x = x_ref[...]                                  # (T, D)

        # ---- unpack the packed weight/param slab (static, tile-aligned slices) ----
        w_qkv = slab_ref[:d, c0:c0 + 3 * d]             # (D, 3D)
        w_out = slab_ref[:d, c1:c1 + d]                 # (D, D)
        w_fc = slab_ref[:d, c2:c2 + 4 * d]              # (D, 4D)
        sp = slab_ref[d:d + 8, :]                       # (8, lane_width) small params
        ln1_w, ln1_b = sp[0, :d], sp[1, :d]
        ln2_w, ln2_b = sp[2, :d], sp[3, :d]
        b_qkv = sp[4, :3 * d]
        b_out = sp[5, :d]
        b_fc = sp[6, :4 * d]
        b_pj = sp[7, :d]

        # ---- additive batch-locality mask generated in-kernel (no HBM operand) ----
        row_b = jax.lax.broadcasted_iota(jnp.int32, (T, T), 0) % n_batch
        col_b = jax.lax.broadcasted_iota(jnp.int32, (T, T), 1) % n_batch
        mask = jnp.where(row_b == col_b, 0.0, NEG_INF).astype(jnp.float32)
        if extra_mask is not None:
            mask = mask + extra_mask

        # ---------------- attention branch ----------------
        xl = _layernorm(x, ln1_w, ln1_b)
        qkv = jnp.dot(xl, w_qkv, preferred_element_type=jnp.float32) + b_qkv
        q = qkv[:, :d]                       # 1/sqrt(dh) already folded into W_q / b_q
        k = qkv[:, d:2 * d]
        v = qkv[:, 2 * d:3 * d]
        kT = k.T                             # single XLU transpose; per-head slices below
                                             # are sublane-aligned (multiples of dh=8)

        attn = jnp.broadcast_to(b_out, (T, d)).astype(jnp.float32)
        for hh in range(n_head):
            lo = hh * dh
            s = jnp.dot(q[:, lo:lo + dh], kT[lo:lo + dh, :],
                        preferred_element_type=jnp.float32)              # (T, T)
            s = s + mask
            s = s - jnp.max(s, axis=-1, keepdims=True)
            p = jnp.exp(s)
            p = p * pl.reciprocal(jnp.sum(p, axis=-1, keepdims=True), approx=True)
            head = jnp.dot(p, v[:, lo:lo + dh],
                           preferred_element_type=jnp.float32)           # (T, dh)
            # per-head accumulation into the out-projection (no concatenate / relayout)
            attn = attn + jnp.dot(head, w_out[lo:lo + dh, :],
                                  preferred_element_type=jnp.float32)    # (T, D)

        x1 = x + attn

        # ---------------- MLP branch ----------------
        xl2 = _layernorm(x1, ln2_w, ln2_b)
        h = jnp.dot(xl2, w_fc, preferred_element_type=jnp.float32) + b_fc
        h = h * jax.nn.sigmoid(1.702 * h)                                 # QuickGELU
        mlp = jnp.dot(h, wpj_ref[...], preferred_element_type=jnp.float32) + b_pj

        y_ref[...] = x1 + mlp

    if with_attn_mask:
        def kernel(x_ref, slab_ref, wpj_ref, am_ref, y_ref):
            compute(x_ref, slab_ref, wpj_ref, am_ref[...], y_ref)
    else:
        def kernel(x_ref, slab_ref, wpj_ref, y_ref):
            compute(x_ref, slab_ref, wpj_ref, None, y_ref)
    return kernel


def prepare_params(p, n_head=N_HEAD):
    """Repack PyTorch-layout parameters into the kernel's fused / packed layout.

    p (PyTorch layout): w_in (3D,D), b_in (3D,), w_out (D,D), b_out (D,),
    ln1_w/ln1_b/ln2_w/ln2_b (D,), w_fc (4D,D), b_fc (4D,), w_pj (D,4D), b_pj (D,).

    Returns (slab, w_pj):
      slab (D+8, W) f32: rows [0:D]   lanes [c0:c0+3D] = fused QKV (query scale folded in)
                                      lanes [c1:c1+D]  = out-projection weight
                                      lanes [c2:c2+4D] = c_fc weight
                         rows [D:D+8] = ln1_w, ln1_b, ln2_w, ln2_b, b_qkv, b_out, b_fc, b_pj
      w_pj (4D, D) f32: c_proj weight (input-major).
    """
    d = p['ln1_w'].shape[0]
    dh = d // n_head
    scale = 1.0 / (dh ** 0.5)
    wq, wk, wv = p['w_in'][:d], p['w_in'][d:2 * d], p['w_in'][2 * d:]
    bq, bk, bv = p['b_in'][:d], p['b_in'][d:2 * d], p['b_in'][2 * d:]
    # Fused QKV, stored (in, out) so the kernel computes x @ W; query scale folded in.
    w_qkv = jnp.concatenate([wq.T * scale, wk.T, wv.T], axis=1)       # (D, 3D)
    b_qkv = jnp.concatenate([bq * scale, bk, bv])                     # (3D,)
    w_out = p['w_out'].T                                              # (D, D)
    w_fc = p['w_fc'].T                                                # (D, 4D)
    w_pj = p['w_pj'].T                                                # (4D, D)

    c0, c1, c2, c3 = _slab_layout(d)

    def lane_pad(m, width):
        m = m.astype(jnp.float32)
        return jnp.pad(m, ((0, 0), (0, width - m.shape[1])))

    w_rows = jnp.concatenate([lane_pad(w_qkv, c1 - c0),
                              lane_pad(w_out, c2 - c1),
                              lane_pad(w_fc, c3 - c2)], axis=1)       # (D, c3)

    def row(v):
        v = v.astype(jnp.float32)
        return jnp.pad(v, (0, c3 - v.shape[0]))

    small = jnp.stack([row(p['ln1_w']), row(p['ln1_b']),
                       row(p['ln2_w']), row(p['ln2_b']),
                       row(b_qkv), row(p['b_out']),
                       row(p['b_fc']), row(p['b_pj'])])               # (8, c3)

    slab = jnp.concatenate([w_rows, small], axis=0)                   # (D+8, c3)
    return slab, w_pj.astype(jnp.float32)


def residual_attention_block(x, packed, n_head=N_HEAD, attn_mask=None):
    """x: (L, N, D) float32 (PyTorch nn.MultiheadAttention layout), packed = prepare_params()."""
    L, N, D = x.shape
    T = L * N
    slab, w_pj = packed

    # Free, contiguous reshape (no transpose): token r <-> (l, n) = (r // N, r % N).
    x2d = x.reshape(T, D)

    flops = int(
        2 * T * D * 3 * D                         # fused QKV
        + 2 * n_head * T * T * (D // n_head) * 2  # scores + P@V
        + 2 * T * D * D                           # out-projection (summed over heads)
        + 2 * T * D * 4 * D                       # c_fc
        + 2 * T * 4 * D * D                       # c_proj
        + 16 * T * D                              # LayerNorms / residuals / GELU mul
    )
    transcendentals = int(n_head * T * T + T * 4 * D + 8 * T)
    bytes_accessed = int(4 * (2 * T * D + slab.size + w_pj.size))
    cost = pl.CostEstimate(flops=flops, transcendentals=transcendentals,
                           bytes_accessed=bytes_accessed)

    with_am = attn_mask is not None
    operands = [x2d, slab, w_pj]
    if with_am:
        # optional (L, L) additive attn_mask from the module, expanded to token space
        am = jnp.repeat(jnp.repeat(attn_mask.astype(jnp.float32), N, axis=0), N, axis=1)
        operands.append(am)

    y2d = pl.pallas_call(
        _make_kernel(D, n_head, N, T, with_attn_mask=with_am),
        out_shape=jax.ShapeDtypeStruct((T, D), x.dtype),
        cost_estimate=cost,
    )(*operands)
    return y2d.reshape(L, N, D)


def reference(x, p, n_head=N_HEAD):
    """Pure-JAX reference matching PyTorch semantics (for verification)."""
    L, N, D = x.shape
    dh = D // n_head

    def ln(z, w, b):
        u = z.mean(-1, keepdims=True)
        s = ((z - u) ** 2).mean(-1, keepdims=True)
        return w * ((z - u) / jnp.sqrt(s + EPS)) + b

    xl = ln(x, p['ln1_w'], p['ln1_b'])
    qkv = xl @ p['w_in'].T + p['b_in']
    q, k, v = jnp.split(qkv, 3, axis=-1)
    q = q.reshape(L, N, n_head, dh) / jnp.sqrt(jnp.float32(dh))
    k = k.reshape(L, N, n_head, dh)
    v = v.reshape(L, N, n_head, dh)
    s = jnp.einsum('qnhd,knhd->nhqk', q, k)
    pa = jax.nn.softmax(s, axis=-1)
    o = jnp.einsum('nhqk,knhd->qnhd', pa, v).reshape(L, N, D)
    attn = o @ p['w_out'].T + p['b_out']
    x1 = x + attn
    x2l = ln(x1, p['ln2_w'], p['ln2_b'])
    h = x2l @ p['w_fc'].T + p['b_fc']
    h = h * jax.nn.sigmoid(1.702 * h)
    return x1 + h @ p['w_pj'].T + p['b_pj']


if __name__ == "__main__":
    key = jax.random.PRNGKey(0)
    ks = jax.random.split(key, 9)
    D = D_MODEL
    f32 = jnp.float32

    def w(k, shape):
        return jax.random.normal(k, shape, f32) * 0.02

    # Synthetic deterministic parameters, stored in PyTorch layout.
    params = dict(
        ln1_w=jnp.ones((D,), f32), ln1_b=jnp.zeros((D,), f32),
        w_in=w(ks[0], (3 * D, D)), b_in=w(ks[1], (3 * D,)),
        w_out=w(ks[2], (D, D)), b_out=w(ks[3], (D,)),
        ln2_w=jnp.ones((D,), f32), ln2_b=jnp.zeros((D,), f32),
        w_fc=w(ks[4], (4 * D, D)), b_fc=w(ks[5], (4 * D,)),
        w_pj=w(ks[6], (D, 4 * D)), b_pj=w(ks[7], (D,)),
    )
    x = jax.random.normal(ks[8], (SEQ, BATCH, D), f32)   # (L, N, D)

    packed = prepare_params(params)
    y = residual_attention_block(x, packed)
    jax.block_until_ready(y)

    with jax.default_matmul_precision('highest'):
        y_ref = reference(x, params)

    assert y.shape == x.shape
    err = float(jnp.max(jnp.abs(y - y_ref)))
    assert jnp.allclose(y, y_ref, atol=2e-2, rtol=2e-2), f"max abs err {err}"
    print("KERNEL_OK")
</pallas_src>

<mosaic_0001>
module attributes {stable_mosaic.version = 11 : i64} {
  func.func @kernel(%arg0: memref<16x32xf32, #tpu.memory_space<vmem>>, %arg1: memref<40x384xf32, #tpu.memory_space<vmem>>, %arg2: memref<128x32xf32, #tpu.memory_space<vmem>>, %arg3: memref<16x32xf32, #tpu.memory_space<vmem>>) attributes {dimension_semantics = [], scalar_prefetch = 0 : i64, scratch_operands = 0 : i64, tpu.core_type = #tpu.core_type<tc>} {
    %c0 = arith.constant 0 : index
    %c0_0 = arith.constant 0 : index
    %0 = vector.load %arg0[%c0, %c0_0] : memref<16x32xf32, #tpu.memory_space<vmem>>, vector<16x32xf32>
    %c0_1 = arith.constant 0 : index
    %c0_2 = arith.constant 0 : index
    %1 = vector.load %arg1[%c0_1, %c0_2] : memref<40x384xf32, #tpu.memory_space<vmem>>, vector<32x96xf32>
    %c0_3 = arith.constant 0 : index
    %c128 = arith.constant 128 : index
    %2 = vector.load %arg1[%c0_3, %c128] : memref<40x384xf32, #tpu.memory_space<vmem>>, vector<32x32xf32>
    %c0_4 = arith.constant 0 : index
    %c256 = arith.constant 256 : index
    %3 = vector.load %arg1[%c0_4, %c256] : memref<40x384xf32, #tpu.memory_space<vmem>>, vector<32x128xf32>
    %c32 = arith.constant 32 : index
    %c0_5 = arith.constant 0 : index
    %4 = vector.load %arg1[%c32, %c0_5] : memref<40x384xf32, #tpu.memory_space<vmem>>, vector<8x384xf32>
    %5 = vector.extract_strided_slice %4 {offsets = [0, 0], sizes = [1, 32], strides = [1, 1]} : vector<8x384xf32> to vector<1x32xf32>
    %6 = vector.shape_cast %5 : vector<1x32xf32> to vector<32xf32>
    %7 = vector.extract_strided_slice %4 {offsets = [1, 0], sizes = [1, 32], strides = [1, 1]} : vector<8x384xf32> to vector<1x32xf32>
    %8 = vector.shape_cast %7 : vector<1x32xf32> to vector<32xf32>
    %9 = vector.extract_strided_slice %4 {offsets = [2, 0], sizes = [1, 32], strides = [1, 1]} : vector<8x384xf32> to vector<1x32xf32>
    %10 = vector.shape_cast %9 : vector<1x32xf32> to vector<32xf32>
    %11 = vector.extract_strided_slice %4 {offsets = [3, 0], sizes = [1, 32], strides = [1, 1]} : vector<8x384xf32> to vector<1x32xf32>
    %12 = vector.shape_cast %11 : vector<1x32xf32> to vector<32xf32>
    %13 = vector.extract_strided_slice %4 {offsets = [4, 0], sizes = [1, 96], strides = [1, 1]} : vector<8x384xf32> to vector<1x96xf32>
    %14 = vector.shape_cast %13 : vector<1x96xf32> to vector<96xf32>
    %15 = vector.extract_strided_slice %4 {offsets = [5, 0], sizes = [1, 32], strides = [1, 1]} : vector<8x384xf32> to vector<1x32xf32>
    %16 = vector.shape_cast %15 : vector<1x32xf32> to vector<32xf32>
    %17 = vector.extract_strided_slice %4 {offsets = [6, 0], sizes = [1, 128], strides = [1, 1]} : vector<8x384xf32> to vector<1x128xf32>
    %18 = vector.shape_cast %17 : vector<1x128xf32> to vector<128xf32>
    %19 = vector.extract_strided_slice %4 {offsets = [7, 0], sizes = [1, 32], strides = [1, 1]} : vector<8x384xf32> to vector<1x32xf32>
    %20 = vector.shape_cast %19 : vector<1x32xf32> to vector<32xf32>
    %21 = tpu.iota {dimensions = array<i32: 0>} : vector<16x16xi32>
    %c2_i32 = arith.constant 2 : i32
    %c0_i32 = arith.constant 0 : i32
    %22 = arith.cmpi eq, %c2_i32, %c0_i32 : i32
    %c1_i32 = arith.constant 1 : i32
    %23 = arith.select %22, %c1_i32, %c2_i32 : i32
    %24 = vector.broadcast %23 : i32 to vector<16x16xi32>
    %25 = arith.remsi %21, %24 : vector<16x16xi32>
    %c0_i32_6 = arith.constant 0 : i32
    %26 = vector.broadcast %c0_i32_6 : i32 to vector<16x16xi32>
    %27 = arith.cmpi ne, %25, %26 : vector<16x16xi32>
    %c0_i32_7 = arith.constant 0 : i32
    %28 = vector.broadcast %c0_i32_7 : i32 to vector<16x16xi32>
    %29 = arith.cmpi slt, %25, %28 : vector<16x16xi32>
    %c0_i32_8 = arith.constant 0 : i32
    %30 = arith.cmpi slt, %23, %c0_i32_8 : i32
    %31 = vector.broadcast %30 : i1 to vector<16x16xi1>
    %32 = vector.broadcast %31 : vector<16x16xi1> to vector<16x16xi1>
    %33 = arith.xori %29, %32 : vector<16x16xi1>
    %34 = arith.andi %33, %27 : vector<16x16xi1>
    %35 = vector.broadcast %23 : i32 to vector<16x16xi32>
    %36 = arith.addi %25, %35 : vector<16x16xi32>
    %37 = arith.select %34, %36, %25 : vector<16x16xi1>, vector<16x16xi32>
    %38 = tpu.iota {dimensions = array<i32: 1>} : vector<16x16xi32>
    %c2_i32_9 = arith.constant 2 : i32
    %c0_i32_10 = arith.constant 0 : i32
    %39 = arith.cmpi eq, %c2_i32_9, %c0_i32_10 : i32
    %c1_i32_11 = arith.constant 1 : i32
    %40 = arith.select %39, %c1_i32_11, %c2_i32_9 : i32
    %41 = vector.broadcast %40 : i32 to vector<16x16xi32>
    %42 = arith.remsi %38, %41 : vector<16x16xi32>
    %c0_i32_12 = arith.constant 0 : i32
    %43 = vector.broadcast %c0_i32_12 : i32 to vector<16x16xi32>
    %44 = arith.cmpi ne, %42, %43 : vector<16x16xi32>
    %c0_i32_13 = arith.constant 0 : i32
    %45 = vector.broadcast %c0_i32_13 : i32 to vector<16x16xi32>
    %46 = arith.cmpi slt, %42, %45 : vector<16x16xi32>
    %c0_i32_14 = arith.constant 0 : i32
    %47 = arith.cmpi slt, %40, %c0_i32_14 : i32
    %48 = vector.broadcast %47 : i1 to vector<16x16xi1>
    %49 = vector.broadcast %48 : vector<16x16xi1> to vector<16x16xi1>
    %50 = arith.xori %46, %49 : vector<16x16xi1>
    %51 = arith.andi %50, %44 : vector<16x16xi1>
    %52 = vector.broadcast %40 : i32 to vector<16x16xi32>
    %53 = arith.addi %42, %52 : vector<16x16xi32>
    %54 = arith.select %51, %53, %42 : vector<16x16xi1>, vector<16x16xi32>
    %55 = arith.cmpi eq, %37, %54 : vector<16x16xi32>
    %cst = arith.constant 0.000000e+00 : f32
    %cst_15 = arith.constant -1.000000e+30 : f32
    %56 = vector.broadcast %cst : f32 to vector<16x16xf32>
    %57 = vector.broadcast %cst_15 : f32 to vector<16x16xf32>
    %58 = arith.select %55, %56, %57 : vector<16x16xi1>, vector<16x16xf32>
    %cst_16 = arith.constant dense<0.000000e+00> : vector<16xf32>
    %59 = vector.multi_reduction <add>, %0, %cst_16 [1] : vector<16x32xf32> to vector<16xf32>
    %60 = vector.shape_cast %59 : vector<16xf32> to vector<16x1xf32>
    %cst_17 = arith.constant 3.200000e+01 : f32
    %61 = vector.broadcast %cst_17 : f32 to vector<16x1xf32>
    %62 = arith.divf %60, %61 : vector<16x1xf32>
    %63 = vector.broadcast %62 : vector<16x1xf32> to vector<16x32xf32>
    %64 = arith.subf %0, %63 : vector<16x32xf32>
    %65 = arith.mulf %64, %64 : vector<16x32xf32>
    %cst_18 = arith.constant dense<0.000000e+00> : vector<16xf32>
    %66 = vector.multi_reduction <add>, %65, %cst_18 [1] : vector<16x32xf32> to vector<16xf32>
    %67 = vector.shape_cast %66 : vector<16xf32> to vector<16x1xf32>
    %cst_19 = arith.constant 3.200000e+01 : f32
    %68 = vector.broadcast %cst_19 : f32 to vector<16x1xf32>
    %69 = arith.divf %67, %68 : vector<16x1xf32>
    %70 = vector.broadcast %62 : vector<16x1xf32> to vector<16x32xf32>
    %71 = arith.subf %0, %70 : vector<16x32xf32>
    %cst_20 = arith.constant 9.99999996E-13 : f32
    %72 = vector.broadcast %cst_20 : f32 to vector<16x1xf32>
    %73 = arith.addf %69, %72 : vector<16x1xf32>
    %74 = math.rsqrt %73 : vector<16x1xf32>
    %75 = vector.broadcast %74 : vector<16x1xf32> to vector<16x32xf32>
    %76 = arith.mulf %71, %75 : vector<16x32xf32>
    %77 = vector.shape_cast %6 : vector<32xf32> to vector<1x32xf32>
    %78 = vector.broadcast %77 : vector<1x32xf32> to vector<16x32xf32>
    %79 = arith.mulf %78, %76 : vector<16x32xf32>
    %80 = vector.shape_cast %8 : vector<32xf32> to vector<1x32xf32>
    %81 = vector.broadcast %80 : vector<1x32xf32> to vector<16x32xf32>
    %82 = arith.addf %79, %81 : vector<16x32xf32>
    %cst_21 = arith.constant dense<0.000000e+00> : vector<16x96xf32>
    %83 = tpu.matmul %82, %1, %cst_21 {dimension_numbers = #tpu.dot_dimension_numbers<[1], [0], [0], [1], [0, 0, 1, 1], [], []>} : vector<16x32xf32>, vector<32x96xf32>, vector<16x96xf32> -> vector<16x96xf32>
    %84 = vector.shape_cast %14 : vector<96xf32> to vector<1x96xf32>
    %85 = vector.broadcast %84 : vector<1x96xf32> to vector<16x96xf32>
    %86 = arith.addf %83, %85 : vector<16x96xf32>
    %87 = vector.extract_strided_slice %86 {offsets = [0, 0], sizes = [16, 32], strides = [1, 1]} : vector<16x96xf32> to vector<16x32xf32>
    %88 = vector.extract_strided_slice %86 {offsets = [0, 32], sizes = [16, 32], strides = [1, 1]} : vector<16x96xf32> to vector<16x32xf32>
    %89 = vector.extract_strided_slice %86 {offsets = [0, 64], sizes = [16, 32], strides = [1, 1]} : vector<16x96xf32> to vector<16x32xf32>
    %90 = tpu.transpose %88, [1, 0] : vector<16x32xf32> -> vector<32x16xf32>
    %91 = vector.shape_cast %16 : vector<32xf32> to vector<1x32xf32>
    %92 = vector.broadcast %91 : vector<1x32xf32> to vector<16x32xf32>
    %93 = vector.extract_strided_slice %87 {offsets = [0, 0], sizes = [16, 8], strides = [1, 1]} : vector<16x32xf32> to vector<16x8xf32>
    %94 = vector.extract_strided_slice %90 {offsets = [0, 0], sizes = [8, 16], strides = [1, 1]} : vector<32x16xf32> to vector<8x16xf32>
    %cst_22 = arith.constant dense<0.000000e+00> : vector<16x16xf32>
    %95 = tpu.matmul %93, %94, %cst_22 {dimension_numbers = #tpu.dot_dimension_numbers<[1], [0], [0], [1], [0, 0, 1, 1], [], []>} : vector<16x8xf32>, vector<8x16xf32>, vector<16x16xf32> -> vector<16x16xf32>
    %96 = arith.addf %95, %58 : vector<16x16xf32>
    %cst_23 = arith.constant dense<0xFF800000> : vector<16xf32>
    %97 = vector.multi_reduction <maximumf>, %96, %cst_23 [1] : vector<16x16xf32> to vector<16xf32>
    %98 = vector.shape_cast %97 : vector<16xf32> to vector<16x1xf32>
    %99 = vector.broadcast %98 : vector<16x1xf32> to vector<16x16xf32>
    %100 = arith.subf %96, %99 : vector<16x16xf32>
    %101 = math.exp %100 : vector<16x16xf32>
    %cst_24 = arith.constant dense<0.000000e+00> : vector<16xf32>
    %102 = vector.multi_reduction <add>, %101, %cst_24 [1] : vector<16x16xf32> to vector<16xf32>
    %103 = vector.shape_cast %102 : vector<16xf32> to vector<16x1xf32>
    %104 = tpu.reciprocal %103 {approx = true} : vector<16x1xf32> -> vector<16x1xf32>
    %105 = vector.broadcast %104 : vector<16x1xf32> to vector<16x16xf32>
    %106 = arith.mulf %101, %105 : vector<16x16xf32>
    %107 = vector.extract_strided_slice %89 {offsets = [0, 0], sizes = [16, 8], strides = [1, 1]} : vector<16x32xf32> to vector<16x8xf32>
    %cst_25 = arith.constant dense<0.000000e+00> : vector<16x8xf32>
    %108 = tpu.matmul %106, %107, %cst_25 {dimension_numbers = #tpu.dot_dimension_numbers<[1], [0], [0], [1], [0, 0, 1, 1], [], []>} : vector<16x16xf32>, vector<16x8xf32>, vector<16x8xf32> -> vector<16x8xf32>
    %109 = vector.extract_strided_slice %2 {offsets = [0, 0], sizes = [8, 32], strides = [1, 1]} : vector<32x32xf32> to vector<8x32xf32>
    %cst_26 = arith.constant dense<0.000000e+00> : vector<16x32xf32>
    %110 = tpu.matmul %108, %109, %cst_26 {dimension_numbers = #tpu.dot_dimension_numbers<[1], [0], [0], [1], [0, 0, 1, 1], [], []>} : vector<16x8xf32>, vector<8x32xf32>, vector<16x32xf32> -> vector<16x32xf32>
    %111 = arith.addf %92, %110 : vector<16x32xf32>
    %112 = vector.extract_strided_slice %87 {offsets = [0, 8], sizes = [16, 8], strides = [1, 1]} : vector<16x32xf32> to vector<16x8xf32>
    %113 = vector.extract_strided_slice %90 {offsets = [8, 0], sizes = [8, 16], strides = [1, 1]} : vector<32x16xf32> to vector<8x16xf32>
    %cst_27 = arith.constant dense<0.000000e+00> : vector<16x16xf32>
    %114 = tpu.matmul %112, %113, %cst_27 {dimension_numbers = #tpu.dot_dimension_numbers<[1], [0], [0], [1], [0, 0, 1, 1], [], []>} : vector<16x8xf32>, vector<8x16xf32>, vector<16x16xf32> -> vector<16x16xf32>
    %115 = arith.addf %114, %58 : vector<16x16xf32>
    %cst_28 = arith.constant dense<0xFF800000> : vector<16xf32>
    %116 = vector.multi_reduction <maximumf>, %115, %cst_28 [1] : vector<16x16xf32> to vector<16xf32>
    %117 = vector.shape_cast %116 : vector<16xf32> to vector<16x1xf32>
    %118 = vector.broadcast %117 : vector<16x1xf32> to vector<16x16xf32>
    %119 = arith.subf %115, %118 : vector<16x16xf32>
    %120 = math.exp %119 : vector<16x16xf32>
    %cst_29 = arith.constant dense<0.000000e+00> : vector<16xf32>
    %121 = vector.multi_reduction <add>, %120, %cst_29 [1] : vector<16x16xf32> to vector<16xf32>
    %122 = vector.shape_cast %121 : vector<16xf32> to vector<16x1xf32>
    %123 = tpu.reciprocal %122 {approx = true} : vector<16x1xf32> -> vector<16x1xf32>
    %124 = vector.broadcast %123 : vector<16x1xf32> to vector<16x16xf32>
    %125 = arith.mulf %120, %124 : vector<16x16xf32>
    %126 = vector.extract_strided_slice %89 {offsets = [0, 8], sizes = [16, 8], strides = [1, 1]} : vector<16x32xf32> to vector<16x8xf32>
    %cst_30 = arith.constant dense<0.000000e+00> : vector<16x8xf32>
    %127 = tpu.matmul %125, %126, %cst_30 {dimension_numbers = #tpu.dot_dimension_numbers<[1], [0], [0], [1], [0, 0, 1, 1], [], []>} : vector<16x16xf32>, vector<16x8xf32>, vector<16x8xf32> -> vector<16x8xf32>
    %128 = vector.extract_strided_slice %2 {offsets = [8, 0], sizes = [8, 32], strides = [1, 1]} : vector<32x32xf32> to vector<8x32xf32>
    %cst_31 = arith.constant dense<0.000000e+00> : vector<16x32xf32>
    %129 = tpu.matmul %127, %128, %cst_31 {dimension_numbers = #tpu.dot_dimension_numbers<[1], [0], [0], [1], [0, 0, 1, 1], [], []>} : vector<16x8xf32>, vector<8x32xf32>, vector<16x32xf32> -> vector<16x32xf32>
    %130 = arith.addf %111, %129 : vector<16x32xf32>
    %131 = vector.extract_strided_slice %87 {offsets = [0, 16], sizes = [16, 8], strides = [1, 1]} : vector<16x32xf32> to vector<16x8xf32>
    %132 = vector.extract_strided_slice %90 {offsets = [16, 0], sizes = [8, 16], strides = [1, 1]} : vector<32x16xf32> to vector<8x16xf32>
    %cst_32 = arith.constant dense<0.000000e+00> : vector<16x16xf32>
    %133 = tpu.matmul %131, %132, %cst_32 {dimension_numbers = #tpu.dot_dimension_numbers<[1], [0], [0], [1], [0, 0, 1, 1], [], []>} : vector<16x8xf32>, vector<8x16xf32>, vector<16x16xf32> -> vector<16x16xf32>
    %134 = arith.addf %133, %58 : vector<16x16xf32>
    %cst_33 = arith.constant dense<0xFF800000> : vector<16xf32>
    %135 = vector.multi_reduction <maximumf>, %134, %cst_33 [1] : vector<16x16xf32> to vector<16xf32>
    %136 = vector.shape_cast %135 : vector<16xf32> to vector<16x1xf32>
    %137 = vector.broadcast %136 : vector<16x1xf32> to vector<16x16xf32>
    %138 = arith.subf %134, %137 : vector<16x16xf32>
    %139 = math.exp %138 : vector<16x16xf32>
    %cst_34 = arith.constant dense<0.000000e+00> : vector<16xf32>
    %140 = vector.multi_reduction <add>, %139, %cst_34 [1] : vector<16x16xf32> to vector<16xf32>
    %141 = vector.shape_cast %140 : vector<16xf32> to vector<16x1xf32>
    %142 = tpu.reciprocal %141 {approx = true} : vector<16x1xf32> -> vector<16x1xf32>
    %143 = vector.broadcast %142 : vector<16x1xf32> to vector<16x16xf32>
    %144 = arith.mulf %139, %143 : vector<16x16xf32>
    %145 = vector.extract_strided_slice %89 {offsets = [0, 16], sizes = [16, 8], strides = [1, 1]} : vector<16x32xf32> to vector<16x8xf32>
    %cst_35 = arith.constant dense<0.000000e+00> : vector<16x8xf32>
    %146 = tpu.matmul %144, %145, %cst_35 {dimension_numbers = #tpu.dot_dimension_numbers<[1], [0], [0], [1], [0, 0, 1, 1], [], []>} : vector<16x16xf32>, vector<16x8xf32>, vector<16x8xf32> -> vector<16x8xf32>
    %147 = vector.extract_strided_slice %2 {offsets = [16, 0], sizes = [8, 32], strides = [1, 1]} : vector<32x32xf32> to vector<8x32xf32>
    %cst_36 = arith.constant dense<0.000000e+00> : vector<16x32xf32>
    %148 = tpu.matmul %146, %147, %cst_36 {dimension_numbers = #tpu.dot_dimension_numbers<[1], [0], [0], [1], [0, 0, 1, 1], [], []>} : vector<16x8xf32>, vector<8x32xf32>, vector<16x32xf32> -> vector<16x32xf32>
    %149 = arith.addf %130, %148 : vector<16x32xf32>
    %150 = vector.extract_strided_slice %87 {offsets = [0, 24], sizes = [16, 8], strides = [1, 1]} : vector<16x32xf32> to vector<16x8xf32>
    %151 = vector.extract_strided_slice %90 {offsets = [24, 0], sizes = [8, 16], strides = [1, 1]} : vector<32x16xf32> to vector<8x16xf32>
    %cst_37 = arith.constant dense<0.000000e+00> : vector<16x16xf32>
    %152 = tpu.matmul %150, %151, %cst_37 {dimension_numbers = #tpu.dot_dimension_numbers<[1], [0], [0], [1], [0, 0, 1, 1], [], []>} : vector<16x8xf32>, vector<8x16xf32>, vector<16x16xf32> -> vector<16x16xf32>
    %153 = arith.addf %152, %58 : vector<16x16xf32>
    %cst_38 = arith.constant dense<0xFF800000> : vector<16xf32>
    %154 = vector.multi_reduction <maximumf>, %153, %cst_38 [1] : vector<16x16xf32> to vector<16xf32>
    %155 = vector.shape_cast %154 : vector<16xf32> to vector<16x1xf32>
    %156 = vector.broadcast %155 : vector<16x1xf32> to vector<16x16xf32>
    %157 = arith.subf %153, %156 : vector<16x16xf32>
    %158 = math.exp %157 : vector<16x16xf32>
    %cst_39 = arith.constant dense<0.000000e+00> : vector<16xf32>
    %159 = vector.multi_reduction <add>, %158, %cst_39 [1] : vector<16x16xf32> to vector<16xf32>
    %160 = vector.shape_cast %159 : vector<16xf32> to vector<16x1xf32>
    %161 = tpu.reciprocal %160 {approx = true} : vector<16x1xf32> -> vector<16x1xf32>
    %162 = vector.broadcast %161 : vector<16x1xf32> to vector<16x16xf32>
    %163 = arith.mulf %158, %162 : vector<16x16xf32>
    %164 = vector.extract_strided_slice %89 {offsets = [0, 24], sizes = [16, 8], strides = [1, 1]} : vector<16x32xf32> to vector<16x8xf32>
    %cst_40 = arith.constant dense<0.000000e+00> : vector<16x8xf32>
    %165 = tpu.matmul %163, %164, %cst_40 {dimension_numbers = #tpu.dot_dimension_numbers<[1], [0], [0], [1], [0, 0, 1, 1], [], []>} : vector<16x16xf32>, vector<16x8xf32>, vector<16x8xf32> -> vector<16x8xf32>
    %166 = vector.extract_strided_slice %2 {offsets = [24, 0], sizes = [8, 32], strides = [1, 1]} : vector<32x32xf32> to vector<8x32xf32>
    %cst_41 = arith.constant dense<0.000000e+00> : vector<16x32xf32>
    %167 = tpu.matmul %165, %166, %cst_41 {dimension_numbers = #tpu.dot_dimension_numbers<[1], [0], [0], [1], [0, 0, 1, 1], [], []>} : vector<16x8xf32>, vector<8x32xf32>, vector<16x32xf32> -> vector<16x32xf32>
    %168 = arith.addf %149, %167 : vector<16x32xf32>
    %169 = arith.addf %0, %168 : vector<16x32xf32>
    %cst_42 = arith.constant dense<0.000000e+00> : vector<16xf32>
    %170 = vector.multi_reduction <add>, %169, %cst_42 [1] : vector<16x32xf32> to vector<16xf32>
    %171 = vector.shape_cast %170 : vector<16xf32> to vector<16x1xf32>
    %cst_43 = arith.constant 3.200000e+01 : f32
    %172 = vector.broadcast %cst_43 : f32 to vector<16x1xf32>
    %173 = arith.divf %171, %172 : vector<16x1xf32>
    %174 = vector.broadcast %173 : vector<16x1xf32> to vector<16x32xf32>
    %175 = arith.subf %169, %174 : vector<16x32xf32>
    %176 = arith.mulf %175, %175 : vector<16x32xf32>
    %cst_44 = arith.constant dense<0.000000e+00> : vector<16xf32>
    %177 = vector.multi_reduction <add>, %176, %cst_44 [1] : vector<16x32xf32> to vector<16xf32>
    %178 = vector.shape_cast %177 : vector<16xf32> to vector<16x1xf32>
    %cst_45 = arith.constant 3.200000e+01 : f32
    %179 = vector.broadcast %cst_45 : f32 to vector<16x1xf32>
    %180 = arith.divf %178, %179 : vector<16x1xf32>
    %181 = vector.broadcast %173 : vector<16x1xf32> to vector<16x32xf32>
    %182 = arith.subf %169, %181 : vector<16x32xf32>
    %cst_46 = arith.constant 9.99999996E-13 : f32
    %183 = vector.broadcast %cst_46 : f32 to vector<16x1xf32>
    %184 = arith.addf %180, %183 : vector<16x1xf32>
    %185 = math.rsqrt %184 : vector<16x1xf32>
    %186 = vector.broadcast %185 : vector<16x1xf32> to vector<16x32xf32>
    %187 = arith.mulf %182, %186 : vector<16x32xf32>
    %188 = vector.shape_cast %10 : vector<32xf32> to vector<1x32xf32>
    %189 = vector.broadcast %188 : vector<1x32xf32> to vector<16x32xf32>
    %190 = arith.mulf %189, %187 : vector<16x32xf32>
    %191 = vector.shape_cast %12 : vector<32xf32> to vector<1x32xf32>
    %192 = vector.broadcast %191 : vector<1x32xf32> to vector<16x32xf32>
    %193 = arith.addf %190, %192 : vector<16x32xf32>
    %cst_47 = arith.constant dense<0.000000e+00> : vector<16x128xf32>
    %194 = tpu.matmul %193, %3, %cst_47 {dimension_numbers = #tpu.dot_dimension_numbers<[1], [0], [0], [1], [0, 0, 1, 1], [], []>} : vector<16x32xf32>, vector<32x128xf32>, vector<16x128xf32> -> vector<16x128xf32>
    %195 = vector.shape_cast %18 : vector<128xf32> to vector<1x128xf32>
    %196 = vector.broadcast %195 : vector<1x128xf32> to vector<16x128xf32>
    %197 = arith.addf %194, %196 : vector<16x128xf32>
    %cst_48 = arith.constant 1.702000e+00 : f32
    %198 = vector.broadcast %cst_48 : f32 to vector<16x128xf32>
    %199 = arith.mulf %198, %197 : vector<16x128xf32>
    %200 = arith.negf %199 : vector<16x128xf32>
    %201 = math.exp %200 : vector<16x128xf32>
    %cst_49 = arith.constant 1.000000e+00 : f32
    %202 = vector.broadcast %cst_49 : f32 to vector<16x128xf32>
    %203 = arith.addf %202, %201 : vector<16x128xf32>
    %204 = arith.divf %202, %203 : vector<16x128xf32>
    %205 = arith.mulf %197, %204 : vector<16x128xf32>
    %c0_50 = arith.constant 0 : index
    %c0_51 = arith.constant 0 : index
    %206 = vector.load %arg2[%c0_50, %c0_51] : memref<128x32xf32, #tpu.memory_space<vmem>>, vector<128x32xf32>
    %cst_52 = arith.constant dense<0.000000e+00> : vector<16x32xf32>
    %207 = tpu.matmul %205, %206, %cst_52 {dimension_numbers = #tpu.dot_dimension_numbers<[1], [0], [0], [1], [0, 0, 1, 1], [], []>} : vector<16x128xf32>, vector<128x32xf32>, vector<16x32xf32> -> vector<16x32xf32>
    %208 = vector.shape_cast %20 : vector<32xf32> to vector<1x32xf32>
    %209 = vector.broadcast %208 : vector<1x32xf32> to vector<16x32xf32>
    %210 = arith.addf %207, %209 : vector<16x32xf32>
    %211 = arith.addf %169, %210 : vector<16x32xf32>
    %c0_53 = arith.constant 0 : index
    %c0_54 = arith.constant 0 : index
    %212 = vector.load %arg3[%c0_53, %c0_54] : memref<16x32xf32, #tpu.memory_space<vmem>>, vector<16x32xf32>
    tpu.vector_store %arg3[%c0_53, %c0_54], %211 {strides = array<i32>} : memref<16x32xf32, #tpu.memory_space<vmem>>, vector<16x32xf32>,
    return
  }
}

</mosaic_0001>

<llo_original>
// kernel: tpu_custom_call.1
$region0: #{tpu_custom_call.1}
  #allocation0 [shape = 'u32[]', space=smem, size = 0x4, offset = 0x4, fixed_abs, tag = 'smem constant byte address 0x4 - core index']
  #allocation1 [shape = 'u32[72,128]{1,0:T(1,128)}', space=vmem, size = 0x9000, scoped, tag = 'internal scratch']
  %s0 = inlined_call_operand.vmem [shape: f32[16,32], index: 0, kind: input, shape index: {}]
  %s1 = inlined_call_operand.vmem [shape: f32[40,384], index: 1, kind: input, shape index: {}]
  %s2 = inlined_call_operand.vmem [shape: f32[128,32], index: 2, kind: input, shape index: {}]
  %s3 = inlined_call_operand.hbm [shape: f32[16,32], index: 3, kind: output, shape index: {}]
  %s4 = sld [smem:[#allocation0]]
  $region22: #{tpu_custom_call.1} parent=0
    _
  %s6 = ssub.s32 1, %s4
  %s7 = scalar_select 0, %s6, %s4
  $region1: #{tpu_custom_call.1} parent=0
    #allocation2 [shape = 'u8[8192]{0}', space=vmem, size = 0x2000, scoped, tag = 'output window, operand 0, single buffered']
    #allocation3 [shape = 's32[1]{0}', space=sflag, size = 0x4, scoped, tag = 'scoped memory for tpu_custom_call.1']
    %8 = vsyncpa [#allocation3], 0
    // Predicated region
    $region2: #{tpu_custom_call.1} parent=1 // pred_check
      _
    $region3: #{tpu_custom_call.1} parent=1 // pred_check_branch
      %10 = sbr.rel (0) target = $region5
    $region4: #{tpu_custom_call.1} parent=1 // pred_region
      _
    $region5: #{tpu_custom_call.1} parent=1 // pred_fallthru
      _
    // Predicated region
    $region6: #{tpu_custom_call.1} parent=1 // pred_check
      _
    $region7: #{tpu_custom_call.1} parent=1 // pred_check_branch
      %12 = sbr.rel (0) target = $region9
    $region8: #{tpu_custom_call.1} parent=1 // pred_region
      _
    $region9: #{tpu_custom_call.1} parent=1 // pred_fallthru
      _
    // Predicated region
    $region10: #{tpu_custom_call.1} parent=1 // pred_check
      _
    $region11: #{tpu_custom_call.1} parent=1 // pred_check_branch
      %14 = sbr.rel (0) target = $region13
    $region12: #{tpu_custom_call.1} parent=1 // pred_region
      _
    $region13: #{tpu_custom_call.1} parent=1 // pred_fallthru
      _
    %v15 = vld [vmem:[%s0] sm:$0xff]
    %v16 = vld [vmem:[%s0 + $0x8] sm:$0xff]
    %v17 = vld [vmem:[%s1] sm:$0xff]
    %v18 = vld [vmem:[%s1 + $0x18] sm:$0xff]
    %v19 = vld [vmem:[%s1 + $0x30] sm:$0xff]
    %v20 = vld [vmem:[%s1 + $0x48] sm:$0xff]
    %v21 = vld [vmem:[%s1 + $0x8] sm:$0xff]
    %v22 = vld [vmem:[%s1 + $0x20] sm:$0xff]
    %v23 = vld [vmem:[%s1 + $0x38] sm:$0xff]
    %v24 = vld [vmem:[%s1 + $0x50] sm:$0xff]
    %v25 = vld [vmem:[%s1 + $0x10] sm:$0xff]
    %v26 = vld [vmem:[%s1 + $0x28] sm:$0xff]
    %v27 = vld [vmem:[%s1 + $0x40] sm:$0xff]
    %v28 = vld [vmem:[%s1 + $0x58] sm:$0xff]
    %v29 = vld [vmem:[%s1 + $0x60] sm:$0xff]
    %v30 = vlaneseq
    %v31 = vshrl.u32 %v30, 7
    %v32 = vadd.s32 %v31, 8
    %vm33 = vcmp.lt.s32.totalorder %v31, 0
    %v34 = vsub.s32 0, %v31
    %v35 = vsel %vm33, %v34, %v31
    %v36 = vshrl.u32 %v35, 1
    %v37 = vand.u32 %v35, 1
    %v38 = vsub.s32 0, %v37
    %v39 = vsel %vm33, %v38, %v37
    %vm40 = vcmp.lt.s32.totalorder %v32, 0
    %v41 = vsub.s32 0, %v32
    %v42 = vsel %vm40, %v41, %v32
    %v43 = vshrl.u32 %v42, 1
    %v44 = vand.u32 %v42, 1
    %v45 = vsub.s32 0, %v44
    %v46 = vsel %vm40, %v45, %v44
    %vm47 = vcmp.ne.s32.totalorder %v39, 0
    %vm48 = vcmp.ne.s32.totalorder %v46, 0
    %vm49 = vcmp.lt.s32.totalorder %v39, 0
    %vm50 = vcmp.lt.s32.totalorder %v46, 0
    %vm51 = vmand %vm49, %vm47
    %vm52 = vmand %vm50, %vm48
    %v53 = vadd.s32 %v39, 2
    %v54 = vadd.s32 %v46, 2
    %v55 = vsel %vm51, %v53, %v39
    %v56 = vsel %vm52, %v54, %v46
    %v57 = vlaneseq
    %v58 = vand.u32 %v57, 127
    %vm59 = vcmp.lt.s32.totalorder %v58, 0
    %v60 = vsub.s32 0, %v58
    %v61 = vsel %vm59, %v60, %v58
    %v62 = vshrl.u32 %v61, 1
    %v63 = vand.u32 %v61, 1
    %v64 = vsub.s32 0, %v63
    %v65 = vsel %vm59, %v64, %v63
    %vm66 = vcmp.ne.s32.totalorder %v65, 0
    %vm67 = vcmp.lt.s32.totalorder %v65, 0
    %vm68 = vmand %vm67, %vm66
    %v69 = vadd.s32 %v65, 2
    %v70 = vsel %vm68, %v69, %v65
    %vm71 = vcmp.eq.s32.totalorder %v55, %v70
    %vm72 = vcmp.eq.s32.totalorder %v56, %v70
    %v73 = vsel %vm71, 0.0, -1e+30
    %v74 = vsel %vm72, 0.0, -1e+30
    %vm75 = vcmask 261120
    %v76 = vsel %vm75, %v15, 0.0
    %77 = vadd.xlane.f32.xlu0 %v76
    %v78 = vpop.xlane.xlu0 %77
    %v79 = vsel %vm75, %v16, 0.0
    %80 = vadd.xlane.f32.xlu0 %v79
    %v81 = vpop.xlane.xlu0 %80
    %v82 = vrcp.pop 32.0
    %v83 = vmul.f32 32.0, %v82
    %v84 = vsub.f32 1.0, %v83
    %v85 = vmul.f32 %v82, %v84
    %v86 = vadd.f32 %v82, %v85
    %vm87 = vweird.f32 %v82
    %v88 = vsel %vm87, %v82, %v86
    %v89 = vmul.f32 %v78, %v88
    %v90 = vmul.f32 %v81, %v88
    %v91 = vsub.f32 %v15, %v89
    %v92 = vsub.f32 %v16, %v90
    %v93 = vmul.f32 %v91, %v91
    %v94 = vmul.f32 %v92, %v92
    %v95 = vsel %vm75, %v93, 0.0
    %96 = vadd.xlane.f32.xlu0 %v95
    %v97 = vpop.xlane.xlu0 %96
    %v98 = vsel %vm75, %v94, 0.0
    %99 = vadd.xlane.f32.xlu0 %v98
    %v100 = vpop.xlane.xlu0 %99
    %v101 = vmul.f32 %v97, %v88
    %v102 = vmul.f32 %v100, %v88
    %v103 = vadd.f32 %v101, 1e-12
    %v104 = vadd.f32 %v102, 1e-12
    %v105 = vrsqrt.pop %v103
    %v106 = vmul.f32 %v105, %v103
    %v107 = vmul.f32 %v106, %v105
    %v108 = vmul.f32 0.5, %v107
    %v109 = vsub.f32 1.5, %v108
    %v110 = vmul.f32 %v105, %v109
    %vm111 = vweird.f32 %v103
    %vm112 = vweird.f32 %v105
    %vm113 = vmor %vm111, %vm112
    %v114 = vsel %vm113, %v105, %v110
    %v115 = vrsqrt.pop %v104
    %v116 = vmul.f32 %v115, %v104
    %v117 = vmul.f32 %v116, %v115
    %v118 = vmul.f32 0.5, %v117
    %v119 = vsub.f32 1.5, %v118
    %v120 = vmul.f32 %v115, %v119
    %vm121 = vweird.f32 %v104
    %vm122 = vweird.f32 %v115
    %vm123 = vmor %vm121, %vm122
    %v124 = vsel %vm123, %v115, %v120
    %v125 = vmul.f32 %v91, %v114
    %v126 = vmul.f32 %v92, %v124
    %v127 = vperm.slane %v29, 0
    %v128 = vmul.f32 %v127, %v125
    %v129 = vmul.f32 %v127, %v126
    %v130 = vperm.slane %v29, 1
    %v131 = vadd.f32 %v128, %v130
    %v132 = vadd.f32 %v129, %v130
    %v133 = vperm.slane %v29, 4
    %v135 = vsel %vm75, %v131, 0
    %v138 = vsel %vm75, %v132, 0
    %140 = vmatpush.msra.mxu0 0.0
    %141 = vmatpush.msra.mxu0 0.0
    %142 = vmatpush.msra.mxu0 0.0
    %143 = vmatpush.msra.mxu0 0.0
    %144 = vmatpush.msra.mxu0 0.0
    %145 = vmatpush.msra.mxu0 0.0
    %146 = vmatpush.msra.mxu0 0.0
    %147 = vmatpush.msra.mxu0 0.0
    %148 = vmatpush.msra.mxu0 0.0
    %149 = vmatpush.msra.mxu0 0.0
    %150 = vmatpush.msra.mxu0 0.0
    %151 = vmatpush.msra.mxu0 0.0
    %152 = vmatpush.msra.mxu0 %v20
    %153 = vmatpush.msra.mxu0 %v19
    %154 = vmatpush.msra.mxu0 %v18
    %155 = vmatpush.msra.mxu0 %v17
    %156 = vmatmul.f32.gmra.mxu0 %v135
    %v157 = vpop.f32.mrf.mxu0
    %v158 = vadd.f32 %v133, %v157
    %159 = vmatmul.f32.gmra.mxu0 %v138
    %v160 = vpop.f32.mrf.mxu0
    %v161 = vadd.f32 %v133, %v160
    %162 = vdwg.mxu0
    %v163 = vperm.slane %v29, 5
    %166 = vrot.lane.b32.xlu0 %v158, 96
    %v167 = vpop.permute.xlu0 %166
    %168 = vrot.lane.b32.xlu0 %v161, 96
    %v169 = vpop.permute.xlu0 %168
    %vm170 = vcmask 64512
    %v171 = vsel %vm170, %v158, 0
    %v173 = vsel %vm170, %v161, 0
    %v175 = vsel %vm170, %v167, 0
    %v177 = vsel %vm170, %v169, 0
    %179 = vmatpush.xpose.msra.mxu0 0.0
    %180 = vmatpush.xpose.msra.mxu0 0.0
    %181 = vmatpush.xpose.msra.mxu0 0.0
    %182 = vmatpush.xpose.msra.mxu0 0.0
    %183 = vmatpush.xpose.msra.mxu0 0.0
    %184 = vmatpush.xpose.msra.mxu0 0.0
    %185 = vmatpush.xpose.msra.mxu0 0.0
    %186 = vmatpush.xpose.msra.mxu0 0.0
    %187 = vmatpush.xpose.msra.mxu0 0.0
    %188 = vmatpush.xpose.msra.mxu0 0.0
    %189 = vmatpush.xpose.msra.mxu0 0.0
    %190 = vmatpush.xpose.msra.mxu0 0.0
    %191 = vmatpush.xpose.msra.mxu0 0.0
    %192 = vmatpush.xpose.msra.mxu0 0.0
    %193 = vmatpush.xpose.msra.mxu0 %v177
    %194 = vmatpush.xpose.msra.mxu0 %v175
    %195 = vmatmul.f32.gmra.mxu0 %v171
    %v196 = vpop.f32.mrf.mxu0
    %v197 = vadd.f32 %v73, %v196
    %198 = vmatmul.f32.gmra.mxu0 %v173
    %v199 = vpop.f32.mrf.mxu0
    %v200 = vadd.f32 %v74, %v199
    %201 = vdwg.mxu0
    %vm202 = vcmask 130048
    %v203 = vsel %vm202, %v197, -inf
    %204 = vmax.xlane.f32.xlu0 %v203
    %v205 = vpop.xlane.xlu0 %204
    %v206 = vsel %vm202, %v200, -inf
    %207 = vmax.xlane.f32.xlu0 %v206
    %v208 = vpop.xlane.xlu0 %207
    %v209 = vsub.f32 %v197, %v205
    %v210 = vsub.f32 %v200, %v208
    %v211 = vmul.f32 %v209, 1.442695
    %v212 = vpow.pop %v211
    %v213 = vmul.f32 %v210, 1.442695
    %v214 = vpow.pop %v213
    %v215 = vsel %vm202, %v212, 0.0
    %216 = vadd.xlane.f32.xlu0 %v215
    %v217 = vpop.xlane.xlu0 %216
    %v218 = vsel %vm202, %v214, 0.0
    %219 = vadd.xlane.f32.xlu0 %v218
    %v220 = vpop.xlane.xlu0 %219
    %v221 = vrcp.pop %v217
    %v222 = vrcp.pop %v220
    %v223 = vmul.f32 %v212, %v221
    %v224 = vmul.f32 %v214, %v222
    %225 = vrot.lane.b32.xlu0 %v158, 64
    %v226 = vpop.permute.xlu0 %225
    %227 = vrot.lane.b32.xlu0 %v161, 64
    %v228 = vpop.permute.xlu0 %227
    %v232 = vsel %vm202, %v223, 0
    %v235 = vsel %vm202, %v224, 0
    %237 = vmatpush.msra.mxu0 0.0
    %238 = vmatpush.msra.mxu0 0.0
    %239 = vmatpush.msra.mxu0 0.0
    %240 = vmatpush.msra.mxu0 0.0
    %241 = vmatpush.msra.mxu0 0.0
    %242 = vmatpush.msra.mxu0 0.0
    %243 = vmatpush.msra.mxu0 0.0
    %244 = vmatpush.msra.mxu0 0.0
    %245 = vmatpush.msra.mxu0 0.0
    %246 = vmatpush.msra.mxu0 0.0
    %247 = vmatpush.msra.mxu0 0.0
    %248 = vmatpush.msra.mxu0 0.0
    %249 = vmatpush.msra.mxu0 0.0
    %250 = vmatpush.msra.mxu0 0.0
    %251 = vmatpush.msra.mxu0 %v228
    %252 = vmatpush.msra.mxu0 %v226
    %253 = vmatmul.f32.gmra.mxu0 %v232
    %v254 = vpop.f32.mrf.mxu0
    %v255 = vadd.f32 0.0, %v254
    %256 = vmatmul.f32.gmra.mxu0 %v235
    %v257 = vpop.f32.mrf.mxu0
    %v258 = vadd.f32 0.0, %v257
    %259 = vdwg.mxu0
    %v261 = vsel %vm170, %v255, 0
    %v264 = vsel %vm170, %v258, 0
    %266 = vmatpush.msra.mxu0 0.0
    %267 = vmatpush.msra.mxu0 0.0
    %268 = vmatpush.msra.mxu0 0.0
    %269 = vmatpush.msra.mxu0 0.0
    %270 = vmatpush.msra.mxu0 0.0
    %271 = vmatpush.msra.mxu0 0.0
    %272 = vmatpush.msra.mxu0 0.0
    %273 = vmatpush.msra.mxu0 0.0
    %274 = vmatpush.msra.mxu0 0.0
    %275 = vmatpush.msra.mxu0 0.0
    %276 = vmatpush.msra.mxu0 0.0
    %277 = vmatpush.msra.mxu0 0.0
    %278 = vmatpush.msra.mxu0 0.0
    %279 = vmatpush.msra.mxu0 0.0
    %280 = vmatpush.msra.mxu0 0.0
    %281 = vmatpush.msra.mxu0 %v21
    %282 = vmatmul.f32.gmra.mxu0 %v261
    %v283 = vpop.f32.mrf.mxu0
    %v284 = vadd.f32 0.0, %v283
    %285 = vmatmul.f32.gmra.mxu0 %v264
    %v286 = vpop.f32.mrf.mxu0
    %v287 = vadd.f32 0.0, %v286
    %288 = vdwg.mxu0
    %v289 = vadd.f32 %v163, %v284
    %v290 = vadd.f32 %v163, %v287
    %291 = vrot.lane.b32.xlu0 %v158, 120
    %v292 = vpop.permute.xlu0 %291
    %293 = vrot.lane.b32.xlu0 %v161, 120
    %v294 = vpop.permute.xlu0 %293
    %295 = vrot.lane.b32.xlu0 %v158, 88
    %v296 = vpop.permute.xlu0 %295
    %297 = vrot.lane.b32.xlu0 %v161, 88
    %v298 = vpop.permute.xlu0 %297
    %v299 = vsel %vm170, %v292, 0
    %v301 = vsel %vm170, %v294, 0
    %v303 = vsel %vm170, %v296, 0
    %v305 = vsel %vm170, %v298, 0
    %307 = vmatpush.xpose.msra.mxu0 0.0
    %308 = vmatpush.xpose.msra.mxu0 0.0
    %309 = vmatpush.xpose.msra.mxu0 0.0
    %310 = vmatpush.xpose.msra.mxu0 0.0
    %311 = vmatpush.xpose.msra.mxu0 0.0
    %312 = vmatpush.xpose.msra.mxu0 0.0
    %313 = vmatpush.xpose.msra.mxu0 0.0
    %314 = vmatpush.xpose.msra.mxu0 0.0
    %315 = vmatpush.xpose.msra.mxu0 0.0
    %316 = vmatpush.xpose.msra.mxu0 0.0
    %317 = vmatpush.xpose.msra.mxu0 0.0
    %318 = vmatpush.xpose.msra.mxu0 0.0
    %319 = vmatpush.xpose.msra.mxu0 0.0
    %320 = vmatpush.xpose.msra.mxu0 0.0
    %321 = vmatpush.xpose.msra.mxu0 %v305
    %322 = vmatpush.xpose.msra.mxu0 %v303
    %323 = vmatmul.f32.gmra.mxu0 %v299
    %v324 = vpop.f32.mrf.mxu0
    %v325 = vadd.f32 %v73, %v324
    %326 = vmatmul.f32.gmra.mxu0 %v301
    %v327 = vpop.f32.mrf.mxu0
    %v328 = vadd.f32 %v74, %v327
    %329 = vdwg.mxu0
    %v330 = vsel %vm202, %v325, -inf
    %331 = vmax.xlane.f32.xlu0 %v330
    %v332 = vpop.xlane.xlu0 %331
    %v333 = vsel %vm202, %v328, -inf
    %334 = vmax.xlane.f32.xlu0 %v333
    %v335 = vpop.xlane.xlu0 %334
    %v336 = vsub.f32 %v325, %v332
    %v337 = vsub.f32 %v328, %v335
    %v338 = vmul.f32 %v336, 1.442695
    %v339 = vpow.pop %v338
    %v340 = vmul.f32 %v337, 1.442695
    %v341 = vpow.pop %v340
    %v342 = vsel %vm202, %v339, 0.0
    %343 = vadd.xlane.f32.xlu0 %v342
    %v344 = vpop.xlane.xlu0 %343
    %v345 = vsel %vm202, %v341, 0.0
    %346 = vadd.xlane.f32.xlu0 %v345
    %v347 = vpop.xlane.xlu0 %346
    %v348 = vrcp.pop %v344
    %v349 = vrcp.pop %v347
    %v350 = vmul.f32 %v339, %v348
    %v351 = vmul.f32 %v341, %v349
    %352 = vrot.lane.b32.xlu0 %v158, 56
    %v353 = vpop.permute.xlu0 %352
    %354 = vrot.lane.b32.xlu0 %v161, 56
    %v355 = vpop.permute.xlu0 %354
    %v359 = vsel %vm202, %v350, 0
    %v362 = vsel %vm202, %v351, 0
    %364 = vmatpush.msra.mxu0 0.0
    %365 = vmatpush.msra.mxu0 0.0
    %366 = vmatpush.msra.mxu0 0.0
    %367 = vmatpush.msra.mxu0 0.0
    %368 = vmatpush.msra.mxu0 0.0
    %369 = vmatpush.msra.mxu0 0.0
    %370 = vmatpush.msra.mxu0 0.0
    %371 = vmatpush.msra.mxu0 0.0
    %372 = vmatpush.msra.mxu0 0.0
    %373 = vmatpush.msra.mxu0 0.0
    %374 = vmatpush.msra.mxu0 0.0
    %375 = vmatpush.msra.mxu0 0.0
    %376 = vmatpush.msra.mxu0 0.0
    %377 = vmatpush.msra.mxu0 0.0
    %378 = vmatpush.msra.mxu0 %v355
    %379 = vmatpush.msra.mxu0 %v353
    %380 = vmatmul.f32.gmra.mxu0 %v359
    %v381 = vpop.f32.mrf.mxu0
    %v382 = vadd.f32 0.0, %v381
    %383 = vmatmul.f32.gmra.mxu0 %v362
    %v384 = vpop.f32.mrf.mxu0
    %v385 = vadd.f32 0.0, %v384
    %386 = vdwg.mxu0
    %v388 = vsel %vm170, %v382, 0
    %v391 = vsel %vm170, %v385, 0
    %393 = vmatpush.msra.mxu0 0.0
    %394 = vmatpush.msra.mxu0 0.0
    %395 = vmatpush.msra.mxu0 0.0
    %396 = vmatpush.msra.mxu0 0.0
    %397 = vmatpush.msra.mxu0 0.0
    %398 = vmatpush.msra.mxu0 0.0
    %399 = vmatpush.msra.mxu0 0.0
    %400 = vmatpush.msra.mxu0 0.0
    %401 = vmatpush.msra.mxu0 0.0
    %402 = vmatpush.msra.mxu0 0.0
    %403 = vmatpush.msra.mxu0 0.0
    %404 = vmatpush.msra.mxu0 0.0
    %405 = vmatpush.msra.mxu0 0.0
    %406 = vmatpush.msra.mxu0 0.0
    %407 = vmatpush.msra.mxu0 0.0
    %408 = vmatpush.msra.mxu0 %v22
    %409 = vmatmul.f32.gmra.mxu0 %v388
    %v410 = vpop.f32.mrf.mxu0
    %v411 = vadd.f32 0.0, %v410
    %412 = vmatmul.f32.gmra.mxu0 %v391
    %v413 = vpop.f32.mrf.mxu0
    %v414 = vadd.f32 0.0, %v413
    %415 = vdwg.mxu0
    %v416 = vadd.f32 %v289, %v411
    %v417 = vadd.f32 %v290, %v414
    %418 = vrot.lane.b32.xlu0 %v158, 112
    %v419 = vpop.permute.xlu0 %418
    %420 = vrot.lane.b32.xlu0 %v161, 112
    %v421 = vpop.permute.xlu0 %420
    %422 = vrot.lane.b32.xlu0 %v158, 80
    %v423 = vpop.permute.xlu0 %422
    %424 = vrot.lane.b32.xlu0 %v161, 80
    %v425 = vpop.permute.xlu0 %424
    %v426 = vsel %vm170, %v419, 0
    %v428 = vsel %vm170, %v421, 0
    %v430 = vsel %vm170, %v423, 0
    %v432 = vsel %vm170, %v425, 0
    %434 = vmatpush.xpose.msra.mxu0 0.0
    %435 = vmatpush.xpose.msra.mxu0 0.0
    %436 = vmatpush.xpose.msra.mxu0 0.0
    %437 = vmatpush.xpose.msra.mxu0 0.0
    %438 = vmatpush.xpose.msra.mxu0 0.0
    %439 = vmatpush.xpose.msra.mxu0 0.0
    %440 = vmatpush.xpose.msra.mxu0 0.0
    %441 = vmatpush.xpose.msra.mxu0 0.0
    %442 = vmatpush.xpose.msra.mxu0 0.0
    %443 = vmatpush.xpose.msra.mxu0 0.0
    %444 = vmatpush.xpose.msra.mxu0 0.0
    %445 = vmatpush.xpose.msra.mxu0 0.0
    %446 = vmatpush.xpose.msra.mxu0 0.0
    %447 = vmatpush.xpose.msra.mxu0 0.0
    %448 = vmatpush.xpose.msra.mxu0 %v432
    %449 = vmatpush.xpose.msra.mxu0 %v430
    %450 = vmatmul.f32.gmra.mxu0 %v426
    %v451 = vpop.f32.mrf.mxu0
    %v452 = vadd.f32 %v73, %v451
    %453 = vmatmul.f32.gmra.mxu0 %v428
    %v454 = vpop.f32.mrf.mxu0
    %v455 = vadd.f32 %v74, %v454
    %456 = vdwg.mxu0
    %v457 = vsel %vm202, %v452, -inf
    %458 = vmax.xlane.f32.xlu0 %v457
    %v459 = vpop.xlane.xlu0 %458
    %v460 = vsel %vm202, %v455, -inf
    %461 = vmax.xlane.f32.xlu0 %v460
    %v462 = vpop.xlane.xlu0 %461
    %v463 = vsub.f32 %v452, %v459
    %v464 = vsub.f32 %v455, %v462
    %v465 = vmul.f32 %v463, 1.442695
    %v466 = vpow.pop %v465
    %v467 = vmul.f32 %v464, 1.442695
    %v468 = vpow.pop %v467
    %v469 = vsel %vm202, %v466, 0.0
    %470 = vadd.xlane.f32.xlu0 %v469
    %v471 = vpop.xlane.xlu0 %470
    %v472 = vsel %vm202, %v468, 0.0
    %473 = vadd.xlane.f32.xlu0 %v472
    %v474 = vpop.xlane.xlu0 %473
    %v475 = vrcp.pop %v471
    %v476 = vrcp.pop %v474
    %v477 = vmul.f32 %v466, %v475
    %v478 = vmul.f32 %v468, %v476
    %479 = vrot.lane.b32.xlu0 %v158, 48
    %v480 = vpop.permute.xlu0 %479
    %481 = vrot.lane.b32.xlu0 %v161, 48
    %v482 = vpop.permute.xlu0 %481
    %v486 = vsel %vm202, %v477, 0
    %v489 = vsel %vm202, %v478, 0
    %491 = vmatpush.msra.mxu0 0.0
    %492 = vmatpush.msra.mxu0 0.0
    %493 = vmatpush.msra.mxu0 0.0
    %494 = vmatpush.msra.mxu0 0.0
    %495 = vmatpush.msra.mxu0 0.0
    %496 = vmatpush.msra.mxu0 0.0
    %497 = vmatpush.msra.mxu0 0.0
    %498 = vmatpush.msra.mxu0 0.0
    %499 = vmatpush.msra.mxu0 0.0
    %500 = vmatpush.msra.mxu0 0.0
    %501 = vmatpush.msra.mxu0 0.0
    %502 = vmatpush.msra.mxu0 0.0
    %503 = vmatpush.msra.mxu0 0.0
    %504 = vmatpush.msra.mxu0 0.0
    %505 = vmatpush.msra.mxu0 %v482
    %506 = vmatpush.msra.mxu0 %v480
    %507 = vmatmul.f32.gmra.mxu0 %v486
    %v508 = vpop.f32.mrf.mxu0
    %v509 = vadd.f32 0.0, %v508
    %510 = vmatmul.f32.gmra.mxu0 %v489
    %v511 = vpop.f32.mrf.mxu0
    %v512 = vadd.f32 0.0, %v511
    %513 = vdwg.mxu0
    %v515 = vsel %vm170, %v509, 0
    %v518 = vsel %vm170, %v512, 0
    %520 = vmatpush.msra.mxu0 0.0
    %521 = vmatpush.msra.mxu0 0.0
    %522 = vmatpush.msra.mxu0 0.0
    %523 = vmatpush.msra.mxu0 0.0
    %524 = vmatpush.msra.mxu0 0.0
    %525 = vmatpush.msra.mxu0 0.0
    %526 = vmatpush.msra.mxu0 0.0
    %527 = vmatpush.msra.mxu0 0.0
    %528 = vmatpush.msra.mxu0 0.0
    %529 = vmatpush.msra.mxu0 0.0
    %530 = vmatpush.msra.mxu0 0.0
    %531 = vmatpush.msra.mxu0 0.0
    %532 = vmatpush.msra.mxu0 0.0
    %533 = vmatpush.msra.mxu0 0.0
    %534 = vmatpush.msra.mxu0 0.0
    %535 = vmatpush.msra.mxu0 %v23
    %536 = vmatmul.f32.gmra.mxu0 %v515
    %v537 = vpop.f32.mrf.mxu0
    %v538 = vadd.f32 0.0, %v537
    %539 = vmatmul.f32.gmra.mxu0 %v518
    %v540 = vpop.f32.mrf.mxu0
    %v541 = vadd.f32 0.0, %v540
    %542 = vdwg.mxu0
    %v543 = vadd.f32 %v416, %v538
    %v544 = vadd.f32 %v417, %v541
    %545 = vrot.lane.b32.xlu0 %v158, 104
    %v546 = vpop.permute.xlu0 %545
    %547 = vrot.lane.b32.xlu0 %v161, 104
    %v548 = vpop.permute.xlu0 %547
    %549 = vrot.lane.b32.xlu0 %v158, 72
    %v550 = vpop.permute.xlu0 %549
    %551 = vrot.lane.b32.xlu0 %v161, 72
    %v552 = vpop.permute.xlu0 %551
    %v553 = vsel %vm170, %v546, 0
    %v555 = vsel %vm170, %v548, 0
    %v557 = vsel %vm170, %v550, 0
    %v559 = vsel %vm170, %v552, 0
    %561 = vmatpush.xpose.msra.mxu0 0.0
    %562 = vmatpush.xpose.msra.mxu0 0.0
    %563 = vmatpush.xpose.msra.mxu0 0.0
    %564 = vmatpush.xpose.msra.mxu0 0.0
    %565 = vmatpush.xpose.msra.mxu0 0.0
    %566 = vmatpush.xpose.msra.mxu0 0.0
    %567 = vmatpush.xpose.msra.mxu0 0.0
    %568 = vmatpush.xpose.msra.mxu0 0.0
    %569 = vmatpush.xpose.msra.mxu0 0.0
    %570 = vmatpush.xpose.msra.mxu0 0.0
    %571 = vmatpush.xpose.msra.mxu0 0.0
    %572 = vmatpush.xpose.msra.mxu0 0.0
    %573 = vmatpush.xpose.msra.mxu0 0.0
    %574 = vmatpush.xpose.msra.mxu0 0.0
    %575 = vmatpush.xpose.msra.mxu0 %v559
    %576 = vmatpush.xpose.msra.mxu0 %v557
    %577 = vmatmul.f32.gmra.mxu0 %v553
    %v578 = vpop.f32.mrf.mxu0
    %v579 = vadd.f32 %v73, %v578
    %580 = vmatmul.f32.gmra.mxu0 %v555
    %v581 = vpop.f32.mrf.mxu0
    %v582 = vadd.f32 %v74, %v581
    %583 = vdwg.mxu0
    %v584 = vsel %vm202, %v579, -inf
    %585 = vmax.xlane.f32.xlu0 %v584
    %v586 = vpop.xlane.xlu0 %585
    %v587 = vsel %vm202, %v582, -inf
    %588 = vmax.xlane.f32.xlu0 %v587
    %v589 = vpop.xlane.xlu0 %588
    %v590 = vsub.f32 %v579, %v586
    %v591 = vsub.f32 %v582, %v589
    %v592 = vmul.f32 %v590, 1.442695
    %v593 = vpow.pop %v592
    %v594 = vmul.f32 %v591, 1.442695
    %v595 = vpow.pop %v594
    %v596 = vsel %vm202, %v593, 0.0
    %597 = vadd.xlane.f32.xlu0 %v596
    %v598 = vpop.xlane.xlu0 %597
    %v599 = vsel %vm202, %v595, 0.0
    %600 = vadd.xlane.f32.xlu0 %v599
    %v601 = vpop.xlane.xlu0 %600
    %v602 = vrcp.pop %v598
    %v603 = vrcp.pop %v601
    %v604 = vmul.f32 %v593, %v602
    %v605 = vmul.f32 %v595, %v603
    %606 = vrot.lane.b32.xlu0 %v158, 40
    %v607 = vpop.permute.xlu0 %606
    %608 = vrot.lane.b32.xlu0 %v161, 40
    %v609 = vpop.permute.xlu0 %608
    %v613 = vsel %vm202, %v604, 0
    %v616 = vsel %vm202, %v605, 0
    %618 = vmatpush.msra.mxu0 0.0
    %619 = vmatpush.msra.mxu0 0.0
    %620 = vmatpush.msra.mxu0 0.0
    %621 = vmatpush.msra.mxu0 0.0
    %622 = vmatpush.msra.mxu0 0.0
    %623 = vmatpush.msra.mxu0 0.0
    %624 = vmatpush.msra.mxu0 0.0
    %625 = vmatpush.msra.mxu0 0.0
    %626 = vmatpush.msra.mxu0 0.0
    %627 = vmatpush.msra.mxu0 0.0
    %628 = vmatpush.msra.mxu0 0.0
    %629 = vmatpush.msra.mxu0 0.0
    %630 = vmatpush.msra.mxu0 0.0
    %631 = vmatpush.msra.mxu0 0.0
    %632 = vmatpush.msra.mxu0 %v609
    %633 = vmatpush.msra.mxu0 %v607
    %634 = vmatmul.f32.gmra.mxu0 %v613
    %v635 = vpop.f32.mrf.mxu0
    %v636 = vadd.f32 0.0, %v635
    %637 = vmatmul.f32.gmra.mxu0 %v616
    %v638 = vpop.f32.mrf.mxu0
    %v639 = vadd.f32 0.0, %v638
    %640 = vdwg.mxu0
    %v642 = vsel %vm170, %v636, 0
    %v645 = vsel %vm170, %v639, 0
    %647 = vmatpush.msra.mxu0 0.0
    %648 = vmatpush.msra.mxu0 0.0
    %649 = vmatpush.msra.mxu0 0.0
    %650 = vmatpush.msra.mxu0 0.0
    %651 = vmatpush.msra.mxu0 0.0
    %652 = vmatpush.msra.mxu0 0.0
    %653 = vmatpush.msra.mxu0 0.0
    %654 = vmatpush.msra.mxu0 0.0
    %655 = vmatpush.msra.mxu0 0.0
    %656 = vmatpush.msra.mxu0 0.0
    %657 = vmatpush.msra.mxu0 0.0
    %658 = vmatpush.msra.mxu0 0.0
    %659 = vmatpush.msra.mxu0 0.0
    %660 = vmatpush.msra.mxu0 0.0
    %661 = vmatpush.msra.mxu0 0.0
    %662 = vmatpush.msra.mxu0 %v24
    %663 = vmatmul.f32.gmra.mxu0 %v642
    %v664 = vpop.f32.mrf.mxu0
    %v665 = vadd.f32 0.0, %v664
    %666 = vmatmul.f32.gmra.mxu0 %v645
    %v667 = vpop.f32.mrf.mxu0
    %v668 = vadd.f32 0.0, %v667
    %669 = vdwg.mxu0
    %v670 = vadd.f32 %v543, %v665
    %v671 = vadd.f32 %v544, %v668
    %v672 = vadd.f32 %v15, %v670
    %v673 = vadd.f32 %v16, %v671
    %v674 = vsel %vm75, %v672, 0.0
    %675 = vadd.xlane.f32.xlu0 %v674
    %v676 = vpop.xlane.xlu0 %675
    %v677 = vsel %vm75, %v673, 0.0
    %678 = vadd.xlane.f32.xlu0 %v677
    %v679 = vpop.xlane.xlu0 %678
    %v680 = vmul.f32 %v676, %v88
    %v681 = vmul.f32 %v679, %v88
    %v682 = vsub.f32 %v672, %v680
    %v683 = vsub.f32 %v673, %v681
    %v684 = vmul.f32 %v682, %v682
    %v685 = vmul.f32 %v683, %v683
    %v686 = vsel %vm75, %v684, 0.0
    %687 = vadd.xlane.f32.xlu0 %v686
    %v688 = vpop.xlane.xlu0 %687
    %v689 = vsel %vm75, %v685, 0.0
    %690 = vadd.xlane.f32.xlu0 %v689
    %v691 = vpop.xlane.xlu0 %690
    %v692 = vmul.f32 %v688, %v88
    %v693 = vmul.f32 %v691, %v88
    %v694 = vadd.f32 %v692, 1e-12
    %v695 = vadd.f32 %v693, 1e-12
    %v696 = vrsqrt.pop %v694
    %v697 = vmul.f32 %v696, %v694
    %v698 = vmul.f32 %v697, %v696
    %v699 = vmul.f32 0.5, %v698
    %v700 = vsub.f32 1.5, %v699
    %v701 = vmul.f32 %v696, %v700
    %vm702 = vweird.f32 %v694
    %vm703 = vweird.f32 %v696
    %vm704 = vmor %vm702, %vm703
    %v705 = vsel %vm704, %v696, %v701
    %v706 = vrsqrt.pop %v695
    %v707 = vmul.f32 %v706, %v695
    %v708 = vmul.f32 %v707, %v706
    %v709 = vmul.f32 0.5, %v708
    %v710 = vsub.f32 1.5, %v709
    %v711 = vmul.f32 %v706, %v710
    %vm712 = vweird.f32 %v695
    %vm713 = vweird.f32 %v706
    %vm714 = vmor %vm712, %vm713
    %v715 = vsel %vm714, %v706, %v711
    %v716 = vmul.f32 %v682, %v705
    %v717 = vmul.f32 %v683, %v715
    %v718 = vperm.slane %v29, 2
    %v719 = vmul.f32 %v718, %v716
    %v720 = vmul.f32 %v718, %v717
    %v721 = vperm.slane %v29, 3
    %v722 = vadd.f32 %v719, %v721
    %v723 = vadd.f32 %v720, %v721
    %v724 = vperm.slane %v29, 6
    %v726 = vsel %vm75, %v722, 0
    %v729 = vsel %vm75, %v723, 0
    %731 = vmatpush.msra.mxu0 0.0
    %732 = vmatpush.msra.mxu0 0.0
    %733 = vmatpush.msra.mxu0 0.0
    %734 = vmatpush.msra.mxu0 0.0
    %735 = vmatpush.msra.mxu0 0.0
    %736 = vmatpush.msra.mxu0 0.0
    %737 = vmatpush.msra.mxu0 0.0
    %738 = vmatpush.msra.mxu0 0.0
    %739 = vmatpush.msra.mxu0 0.0
    %740 = vmatpush.msra.mxu0 0.0
    %741 = vmatpush.msra.mxu0 0.0
    %742 = vmatpush.msra.mxu0 0.0
    %743 = vmatpush.msra.mxu0 %v28
    %744 = vmatpush.msra.mxu0 %v27
    %745 = vmatpush.msra.mxu0 %v26
    %746 = vmatpush.msra.mxu0 %v25
    %747 = vmatmul.f32.gmra.mxu0 %v726
    %v748 = vpop.f32.mrf.mxu0
    %v749 = vadd.f32 %v724, %v748
    %750 = vmatmul.f32.gmra.mxu0 %v729
    %v751 = vpop.f32.mrf.mxu0
    %v752 = vadd.f32 %v724, %v751
    %753 = vdwg.mxu0
    %v754 = vmul.f32 %v749, 1.702
    %v755 = vmul.f32 %v752, 1.702
    %v756 = vxor.u32 %v754, 2147483648
    %v757 = vxor.u32 %v755, 2147483648
    %v758 = vmul.f32 %v756, 1.442695
    %v759 = vpow.pop %v758
    %v760 = vmul.f32 %v757, 1.442695
    %v761 = vpow.pop %v760
    %v762 = vadd.f32 %v759, 1.0
    %v763 = vadd.f32 %v761, 1.0
    %v764 = vrcp.pop %v762
    %v765 = vmul.f32 %v762, %v764
    %v766 = vsub.f32 1.0, %v765
    %v767 = vmul.f32 %v764, %v766
    %v768 = vadd.f32 %v764, %v767
    %vm769 = vweird.f32 %v762
    %vm770 = vweird.f32 %v764
    %vm771 = vmor %vm769, %vm770
    %v772 = vsel %vm771, %v764, %v768
    %v773 = vand.u32 2147483647, %v762
    %vm774 = vcmp.eq.f32.partialorder %v773, 8.507059e+37
    %v775 = vand.u32 %v762, 2147483648
    %v776 = vor.u32 1.1754944e-38, %v775
    %v777 = vsel %vm774, %v776, %v772
    %v778 = vmul.f32 1.0, %v777
    %v779 = vrcp.pop %v763
    %v780 = vmul.f32 %v763, %v779
    %v781 = vsub.f32 1.0, %v780
    %v782 = vmul.f32 %v779, %v781
    %v783 = vadd.f32 %v779, %v782
    %vm784 = vweird.f32 %v763
    %vm785 = vweird.f32 %v779
    %vm786 = vmor %vm784, %vm785
    %v787 = vsel %vm786, %v779, %v783
    %v788 = vand.u32 2147483647, %v763
    %vm789 = vcmp.eq.f32.partialorder %v788, 8.507059e+37
    %v790 = vand.u32 %v763, 2147483648
    %v791 = vor.u32 1.1754944e-38, %v790
    %v792 = vsel %vm789, %v791, %v787
    %v793 = vmul.f32 1.0, %v792
    %v794 = vmul.f32 %v749, %v778
    %v795 = vmul.f32 %v752, %v793
    %v796 = vld [vmem:[%s2] sm:$0xff]
    %v797 = vld [vmem:[%s2 + $0x8] sm:$0xff]
    %v798 = vld [vmem:[%s2 + $0x10] sm:$0xff]
    %v799 = vld [vmem:[%s2 + $0x18] sm:$0xff]
    %v800 = vld [vmem:[%s2 + $0x20] sm:$0xff]
    %v801 = vld [vmem:[%s2 + $0x28] sm:$0xff]
    %v802 = vld [vmem:[%s2 + $0x30] sm:$0xff]
    %v803 = vld [vmem:[%s2 + $0x38] sm:$0xff]
    %v804 = vld [vmem:[%s2 + $0x40] sm:$0xff]
    %v805 = vld [vmem:[%s2 + $0x48] sm:$0xff]
    %v806 = vld [vmem:[%s2 + $0x50] sm:$0xff]
    %v807 = vld [vmem:[%s2 + $0x58] sm:$0xff]
    %v808 = vld [vmem:[%s2 + $0x60] sm:$0xff]
    %v809 = vld [vmem:[%s2 + $0x68] sm:$0xff]
    %v810 = vld [vmem:[%s2 + $0x70] sm:$0xff]
    %v811 = vld [vmem:[%s2 + $0x78] sm:$0xff]
    %v812 = vperm.slane %v29, 7
    %813 = vmatpush.msra.mxu0 %v811
    %814 = vmatpush.msra.mxu0 %v810
    %815 = vmatpush.msra.mxu0 %v809
    %816 = vmatpush.msra.mxu0 %v808
    %817 = vmatpush.msra.mxu0 %v807
    %818 = vmatpush.msra.mxu0 %v806
    %819 = vmatpush.msra.mxu0 %v805
    %820 = vmatpush.msra.mxu0 %v804
    %821 = vmatpush.msra.mxu0 %v803
    %822 = vmatpush.msra.mxu0 %v802
    %823 = vmatpush.msra.mxu0 %v801
    %824 = vmatpush.msra.mxu0 %v800
    %825 = vmatpush.msra.mxu0 %v799
    %826 = vmatpush.msra.mxu0 %v798
    %827 = vmatpush.msra.mxu0 %v797
    %828 = vmatpush.msra.mxu0 %v796
    %829 = vmatmul.f32.gmra.mxu0 %v794
    %v830 = vpop.f32.mrf.mxu0
    %v831 = vadd.f32 %v812, %v830
    %832 = vmatmul.f32.gmra.mxu0 %v795
    %v833 = vpop.f32.mrf.mxu0
    %v834 = vadd.f32 %v812, %v833
    %835 = vdwg.mxu0
    %v836 = vadd.f32 %v672, %v831
    %v837 = vadd.f32 %v673, %v834
    %838 = vst.msk [vmem:[#allocation2] sm:$0xff] %vm75, %v836
    %839 = vst.msk [vmem:[#allocation2 + $0x8] sm:$0xff] %vm75, %v837
    // Predicated region
    $region14: #{tpu_custom_call.1} parent=1 // pred_check
      _
    $region15: #{tpu_custom_call.1} parent=1 // pred_check_branch
      %841 = sbr.rel (0) target = $region17
    $region16: #{tpu_custom_call.1} parent=1 // pred_region
      %843 = vsyncadd [#allocation3], 0
      %s844 = sshll.u32 [#allocation2], 4
      %s845 = int_to_ptr.vmem [resolvable:$true] %s844
      %s846 = sshll.u32 %s3, 4
      %s847 = int_to_ptr.hbm [resolvable:$true] %s846
      %852 = dma.vmem_to_hbm [thread:$0]  %s845, 256, %s847, [#allocation3], 128, 128, 8
    $region17: #{tpu_custom_call.1} parent=1 // pred_fallthru
      _
    // Predicated region
    $region18: #{tpu_custom_call.1} parent=1 // pred_check
      _
    $region19: #{tpu_custom_call.1} parent=1 // pred_check_branch
      %854 = sbr.rel (0) target = $region21
    $region20: #{tpu_custom_call.1} parent=1 // pred_region
      %856 = dma.done [#allocation3], 256
    $region21: #{tpu_custom_call.1} parent=1 // pred_fallthru
      _
    %857 = vsyncpa [#allocation3], 1

</llo_original>
